<compile_context>
chip_gen: v7x
topology: tpu7x:2x2x1
jax: 0.10.0
libtpu: 0.0.40
codegen_flags: <defaults>
</compile_context>

<pallas_src>
import functools

import jax
import jax.numpy as jnp
from jax.experimental import pallas as pl
from jax.experimental.pallas import tpu as pltpu


def _mlp_kernel(xT_ref, w1_ref, b1_ref, w2_ref, b2_ref, o_ref, *, fc2_on_mxu):
    # fc1 on the MXU: (H, D_in) @ (D_in, TM) -> (H, TM). Inputs already bf16, f32 acc.
    hT = jnp.dot(w1_ref[...], xT_ref[...], preferred_element_type=jnp.float32)
    # Bias + ReLU in f32 on the VPU; (H, 1) broadcasts across the lane (batch) axis.
    hT = jnp.maximum(hT + b1_ref[...], 0.0)
    if fc2_on_mxu:
        # Skinny (1, H) @ (H, TM) MXU matmul: one bf16 cast per hT element instead of
        # 3-4 VALU ops/element when d_in is small and the VALU slot would bind.
        z = jnp.dot(w2_ref[...], hT.astype(w2_ref.dtype),
                    preferred_element_type=jnp.float32) + b2_ref[0]
    else:
        # Large-d_in regime (MXU/DMA-bound): VPU multiply + XLU sublane reduction.
        z = jnp.sum(hT * w2_ref[...], axis=0, keepdims=True) + b2_ref[0]
    # sigmoid(z) = 1 / (1 + exp(-z)); approximate reciprocal rides the EUP slot.
    y = pl.reciprocal(1.0 + jnp.exp(-z), approx=True)
    o_ref[...] = y.astype(o_ref.dtype)


def linear_model_forward(x, w1, b1, w2, b2, *, block_b=1024, mxu_dtype=jnp.bfloat16,
                         vmem_budget_bytes=48 * 1024 * 1024):
    """Forward pass of arch2vec LinearModel.

    Args (PyTorch-native parameter layouts):
      x : (B, D_in) float32
      w1: (H, D_in)          -- fc1.weight
      b1: (H,)               -- fc1.bias
      w2: (1, H) or (H,)     -- fc2.weight
      b2: (1,) or scalar     -- fc2.bias
    Returns:
      (B, 1) float32 == sigmoid(fc2(relu(fc1(x)))).

    mxu_dtype=jnp.float32 is a debug-only path (multi-pass on the bf16-native MXU and
    2x the activation DMA bytes -- do not use it on the hot path, especially on v5e).
    """
    x = jnp.asarray(x, jnp.float32)
    B, d_in = x.shape
    H = w1.shape[0]
    elt = jnp.dtype(mxu_dtype).itemsize

    # ---- Batch tiling (lane axis). -------------------------------------------------
    lanes = pl.cdiv(B, 128) * 128                     # batch padded to lane granularity
    tm = max(128, (int(block_b) // 128) * 128)        # force a multiple of 128 lanes
    tm = min(tm, lanes)
    # v7x: make sure there are >= 2 tiles when the batch is big enough so the
    # "parallel" grid axis can shard across both TensorCores.
    if lanes >= 256:
        tm = min(tm, pl.cdiv(B, 2 * 128) * 128)

    # VMEM-fit guard: double-buffered x tile + resident (single-buffered) w1 + extras
    # must fit the scoped VMEM budget; shrink the batch tile if not.
    w1_bytes = H * d_in * elt
    fixed_bytes = w1_bytes + H * 128 * 4 * 2 + (1 << 20)     # w1 + bias/w2 columns + slack

    def _tile_bytes(t):
        return 2 * d_in * t * elt + 2 * 8 * t * 4            # x tile (x2) + out tile (x2)

    while tm > 128 and fixed_bytes + _tile_bytes(tm) > vmem_budget_bytes:
        tm -= 128
    # TODO(synk): if w1 alone ever exceeds the VMEM budget (huge H*d_in, esp. on v7x's
    # 64 MiB), add a d_in reduction grid axis ("arbitrary") with an f32 accumulator
    # instead of holding fc1.weight fully resident.

    b_pad = pl.cdiv(B, tm) * tm
    n_tiles = b_pad // tm

    # ---- Operand preparation (casts fused into the transpose/pad). ------------------
    if b_pad == B:
        xT = x.T.astype(mxu_dtype)                     # no padding pass at all
    else:
        xT = jnp.zeros((d_in, b_pad), mxu_dtype).at[:, :B].set(x.T.astype(mxu_dtype))
    w1c = w1.astype(mxu_dtype)                         # resident; pre-cast once
    b1c = jnp.reshape(b1, (H, 1)).astype(jnp.float32)
    fc2_on_mxu = d_in < 64                             # VALU-bound regime -> use MXU
    if fc2_on_mxu:
        w2c = jnp.reshape(w2, (1, H)).astype(mxu_dtype)
    else:
        w2c = jnp.reshape(w2, (H, 1)).astype(jnp.float32)
    b2s = jnp.reshape(b2, (1,)).astype(jnp.float32)

    kernel = functools.partial(_mlp_kernel, fc2_on_mxu=fc2_on_mxu)

    vmem_need = fixed_bytes + _tile_bytes(tm)
    vmem_limit = int(min(128 * 1024 * 1024, max(32 * 1024 * 1024, 2 * vmem_need)))

    cost = pl.CostEstimate(
        flops=2 * b_pad * d_in * H + 2 * b_pad * H,
        transcendentals=b_pad,                          # exp per batch element
        bytes_accessed=(d_in * b_pad * elt) + w1_bytes + (H * 4) + (H * elt) + (b_pad * 4),
    )

    out = pl.pallas_call(
        kernel,
        out_shape=jax.ShapeDtypeStruct((1, b_pad), jnp.float32),
        grid=(n_tiles,),
        in_specs=[
            # Streamed x^T batch tile (bf16, double-buffered by default).
            pl.BlockSpec((d_in, tm), lambda i: (0, i),
                         memory_space=pltpu.MemorySpace.VMEM),
            # Constant blocks: single-buffered (they never change across grid steps).
            pl.BlockSpec((H, d_in), lambda i: (0, 0),
                         memory_space=pltpu.MemorySpace.VMEM,
                         pipeline_mode=pl.Buffered(1)),          # fc1.weight (bf16)
            pl.BlockSpec((H, 1), lambda i: (0, 0),
                         memory_space=pltpu.MemorySpace.VMEM,
                         pipeline_mode=pl.Buffered(1)),          # fc1.bias column (f32)
            pl.BlockSpec(w2c.shape, lambda i: (0, 0),
                         memory_space=pltpu.MemorySpace.VMEM,
                         pipeline_mode=pl.Buffered(1)),          # fc2.weight
            pl.BlockSpec(memory_space=pltpu.MemorySpace.SMEM),   # fc2.bias scalar
        ],
        out_specs=pl.BlockSpec((1, tm), lambda i: (0, i),
                               memory_space=pltpu.MemorySpace.VMEM),
        compiler_params=pltpu.CompilerParams(
            # Batch tiles are independent -> shard across both TCs on v7x.
            dimension_semantics=("parallel",),
            vmem_limit_bytes=vmem_limit,
            # Let XLA fuse the transpose/pad/cast producer into the x^T operand
            # instead of materializing an extra padded copy of x in HBM.
            allow_input_fusion=[True, False, False, False, False],
        ),
        cost_estimate=cost,
    )(xT, w1c, b1c, w2c, b2s)

    # Lane-dense (1, b_pad) row back to the torch-shaped (B, 1) column.
    # NOTE: padded lanes out[:, B:] contain junk (sigmoid of bias-only); always slice.
    return out[0, :B].reshape(B, 1)


def init_params(key, input_dim, hid_dim):
    """nn.Linear-style U(-1/sqrt(fan_in), 1/sqrt(fan_in)) init, torch layouts."""
    k1, k2, k3, k4 = jax.random.split(key, 4)
    bound1 = 1.0 / jnp.sqrt(jnp.float32(input_dim))
    bound2 = 1.0 / jnp.sqrt(jnp.float32(hid_dim))
    w1 = jax.random.uniform(k1, (hid_dim, input_dim), jnp.float32, -bound1, bound1)
    b1 = jax.random.uniform(k2, (hid_dim,), jnp.float32, -bound1, bound1)
    w2 = jax.random.uniform(k3, (1, hid_dim), jnp.float32, -bound2, bound2)
    b2 = jax.random.uniform(k4, (1,), jnp.float32, -bound2, bound2)
    return w1, b1, w2, b2


if __name__ == "__main__":
    batch, input_dim, hid_dim = 8, 32, 32

    key = jax.random.PRNGKey(0)
    kx, kp = jax.random.split(key)
    x = jax.random.normal(kx, (batch, input_dim), jnp.float32)
    w1, b1, w2, b2 = init_params(kp, input_dim, hid_dim)

    # Pure-JAX f32 reference (matches the PyTorch module).
    h_ref = jnp.maximum(x @ w1.T + b1, 0.0)
    y_ref = jax.nn.sigmoid(h_ref @ w2.T + b2)

    # Hot path: bf16 MXU inputs, f32 accumulation + f32 epilogue, approx-sigmoid recip.
    y = jax.block_until_ready(linear_model_forward(x, w1, b1, w2, b2))
    assert y.shape == (batch, 1)
    max_err = float(jnp.max(jnp.abs(y - y_ref)))
    assert jnp.allclose(y, y_ref, atol=2e-2), max_err

    print("KERNEL_OK")
</pallas_src>

<mosaic_0001>
module attributes {stable_mosaic.version = 11 : i64} {
  func.func @_mlp_kernel(%arg0: i32, %arg1: memref<32x128xbf16, #tpu.memory_space<vmem>>, %arg2: memref<32x32xbf16, #tpu.memory_space<vmem>>, %arg3: memref<32x1xf32, #tpu.memory_space<vmem>>, %arg4: memref<1x32xbf16, #tpu.memory_space<vmem>>, %arg5: memref<1xf32, #tpu.memory_space<smem>>, %arg6: memref<1x128xf32, #tpu.memory_space<vmem>>) attributes {dimension_semantics = [#tpu.dimension_semantics<parallel>], iteration_bounds = array<i64: 1>, scalar_prefetch = 0 : i64, scratch_operands = 0 : i64, tpu.core_type = #tpu.core_type<tc>, window_params = [{transform_indices = @transform_0, window_bounds = array<i64: 32, 128>}, {pipeline_mode = #tpu.pipeline_mode<synchronous>, transform_indices = @transform_1, window_bounds = array<i64: 32, 32>}, {pipeline_mode = #tpu.pipeline_mode<synchronous>, transform_indices = @transform_2, window_bounds = array<i64: 32, 1>}, {pipeline_mode = #tpu.pipeline_mode<synchronous>, transform_indices = @transform_3, window_bounds = array<i64: 1, 32>}, {transform_indices = @transform_4, window_bounds = array<i64: 1>}, {transform_indices = @transform_5, window_bounds = array<i64: 1, 128>}]} {
    %c0 = arith.constant 0 : index
    %c0_0 = arith.constant 0 : index
    %0 = vector.load %arg2[%c0, %c0_0] : memref<32x32xbf16, #tpu.memory_space<vmem>>, vector<32x32xbf16>
    %c0_1 = arith.constant 0 : index
    %c0_2 = arith.constant 0 : index
    %1 = vector.load %arg1[%c0_1, %c0_2] : memref<32x128xbf16, #tpu.memory_space<vmem>>, vector<32x128xbf16>
    %cst = arith.constant dense<0.000000e+00> : vector<32x128xf32>
    %2 = tpu.matmul %0, %1, %cst {dimension_numbers = #tpu.dot_dimension_numbers<[1], [0], [0], [1], [0, 0, 1, 1], [], []>} : vector<32x32xbf16>, vector<32x128xbf16>, vector<32x128xf32> -> vector<32x128xf32>
    %c0_3 = arith.constant 0 : index
    %c0_4 = arith.constant 0 : index
    %3 = vector.load %arg3[%c0_3, %c0_4] : memref<32x1xf32, #tpu.memory_space<vmem>>, vector<32x1xf32>
    %4 = vector.broadcast %3 : vector<32x1xf32> to vector<32x128xf32>
    %5 = arith.addf %2, %4 : vector<32x128xf32>
    %cst_5 = arith.constant 0.000000e+00 : f32
    %6 = vector.broadcast %cst_5 : f32 to vector<32x128xf32>
    %7 = arith.maximumf %5, %6 : vector<32x128xf32>
    %c0_6 = arith.constant 0 : index
    %c0_7 = arith.constant 0 : index
    %8 = vector.load %arg4[%c0_6, %c0_7] : memref<1x32xbf16, #tpu.memory_space<vmem>>, vector<1x32xbf16>
    %9 = arith.truncf %7 : vector<32x128xf32> to vector<32x128xbf16>
    %cst_8 = arith.constant dense<0.000000e+00> : vector<1x128xf32>
    %10 = tpu.matmul %8, %9, %cst_8 {dimension_numbers = #tpu.dot_dimension_numbers<[1], [0], [0], [1], [0, 0, 1, 1], [], []>} : vector<1x32xbf16>, vector<32x128xbf16>, vector<1x128xf32> -> vector<1x128xf32>
    %c0_9 = arith.constant 0 : index
    %11 = memref.load %arg5[%c0_9] : memref<1xf32, #tpu.memory_space<smem>>
    %12 = vector.broadcast %11 : f32 to vector<1x128xf32>
    %13 = arith.addf %10, %12 : vector<1x128xf32>
    %cst_10 = arith.constant 0.000000e+00 : f32
    %14 = vector.broadcast %cst_10 : f32 to vector<1x128xf32>
    %15 = arith.subf %14, %13 : vector<1x128xf32>
    %16 = math.exp %15 : vector<1x128xf32>
    %cst_11 = arith.constant 1.000000e+00 : f32
    %17 = vector.broadcast %cst_11 : f32 to vector<1x128xf32>
    %18 = arith.addf %17, %16 : vector<1x128xf32>
    %19 = tpu.reciprocal %18 {approx = true} : vector<1x128xf32> -> vector<1x128xf32>
    %c0_12 = arith.constant 0 : index
    %c0_13 = arith.constant 0 : index
    %20 = vector.load %arg6[%c0_12, %c0_13] : memref<1x128xf32, #tpu.memory_space<vmem>>, vector<1x128xf32>
    tpu.vector_store %arg6[%c0_12, %c0_13], %19 {strides = array<i32>} : memref<1x128xf32, #tpu.memory_space<vmem>>, vector<1x128xf32>,
    return
  }
  func.func @transform_0(%arg0: i32) -> (i32, i32) {
    %c0_i32 = arith.constant 0 : i32
    %c0_i32_0 = arith.constant 0 : i32
    return %c0_i32, %arg0 : i32, i32
  }
  func.func @transform_1(%arg0: i32) -> (i32, i32) {
    %c0_i32 = arith.constant 0 : i32
    %c0_i32_0 = arith.constant 0 : i32
    %c0_i32_1 = arith.constant 0 : i32
    return %c0_i32, %c0_i32_0 : i32, i32
  }
  func.func @transform_2(%arg0: i32) -> (i32, i32) {
    %c0_i32 = arith.constant 0 : i32
    %c0_i32_0 = arith.constant 0 : i32
    %c0_i32_1 = arith.constant 0 : i32
    return %c0_i32, %c0_i32_0 : i32, i32
  }
  func.func @transform_3(%arg0: i32) -> (i32, i32) {
    %c0_i32 = arith.constant 0 : i32
    %c0_i32_0 = arith.constant 0 : i32
    %c0_i32_1 = arith.constant 0 : i32
    return %c0_i32, %c0_i32_0 : i32, i32
  }
  func.func @transform_4(%arg0: i32) -> i32 {
    %c0_i32 = arith.constant 0 : i32
    %c0_i32_0 = arith.constant 0 : i32
    return %c0_i32 : i32
  }
  func.func @transform_5(%arg0: i32) -> (i32, i32) {
    %c0_i32 = arith.constant 0 : i32
    %c0_i32_0 = arith.constant 0 : i32
    return %c0_i32, %arg0 : i32, i32
  }
}

</mosaic_0001>

<llo_original>
// kernel: tpu_custom_call.1
$region0: #{tpu_custom_call.1}
  #allocation0 [shape = 'u32[]', space=smem, size = 0x4, offset = 0x4, fixed_abs, tag = 'smem constant byte address 0x4 - core index']
  #allocation1 [shape = 'u32[144,128]{1,0:T(1,128)}', space=vmem, size = 0x12000, scoped, tag = 'internal scratch']
  #allocation2 [shape = 'f32[1]{0:T(128)S(6)}', space=smem, size = 0x200, scoped, tag = 'scoped memory for tpu_custom_call.1']
  %s0 = inlined_call_operand.vmem [shape: bf16[32,128], index: 0, kind: input, shape index: {}]
  %s1 = inlined_call_operand.vmem [shape: bf16[32,32], index: 1, kind: input, shape index: {}]
  %s2 = inlined_call_operand.vmem [shape: f32[32,1], index: 2, kind: input, shape index: {}]
  %s3 = inlined_call_operand.vmem [shape: bf16[1,32], index: 3, kind: input, shape index: {}]
  %s4 = inlined_call_operand.<no memory space> [shape: f32[1], index: 4, kind: input, shape index: {}]
  %s5 = inlined_call_operand.hbm [shape: f32[1,128], index: 5, kind: output, shape index: {}]
  %s6 = sld [smem:[#allocation0]]
  $region30: #{tpu_custom_call.1} parent=0
    _
  %s8 = ssub.s32 1, %s6
  %s9 = scalar_select 0, %s8, %s6
  %10 = sst [smem:[#allocation2]] %s4
  $region1: #{tpu_custom_call.1} parent=0
    #allocation3 [shape = 'u8[512]{0}', space=vmem, size = 0x400, scoped, tag = 'output window, operand 0, single buffered']
    #allocation4 [shape = 's32[1]{0}', space=sflag, size = 0x4, scoped, tag = 'scoped memory for tpu_custom_call.1']
    %11 = vsyncpa [#allocation4], 0
    // Predicated region
    $region2: #{tpu_custom_call.1} parent=1 // pred_check
      _
    $region3: #{tpu_custom_call.1} parent=1 // pred_check_branch
      %13 = sbr.rel (0) target = $region5
    $region4: #{tpu_custom_call.1} parent=1 // pred_region
      _
    $region5: #{tpu_custom_call.1} parent=1 // pred_fallthru
      _
    // Predicated region
    $region6: #{tpu_custom_call.1} parent=1 // pred_check
      _
    $region7: #{tpu_custom_call.1} parent=1 // pred_check_branch
      %15 = sbr.rel (0) target = $region9
    $region8: #{tpu_custom_call.1} parent=1 // pred_region
      _
    $region9: #{tpu_custom_call.1} parent=1 // pred_fallthru
      _
    // Predicated region
    $region10: #{tpu_custom_call.1} parent=1 // pred_check
      _
    $region11: #{tpu_custom_call.1} parent=1 // pred_check_branch
      %17 = sbr.rel (0) target = $region13
    $region12: #{tpu_custom_call.1} parent=1 // pred_region
      _
    $region13: #{tpu_custom_call.1} parent=1 // pred_fallthru
      _
    // Predicated region
    $region14: #{tpu_custom_call.1} parent=1 // pred_check
      _
    $region15: #{tpu_custom_call.1} parent=1 // pred_check_branch
      %19 = sbr.rel (0) target = $region17
    $region16: #{tpu_custom_call.1} parent=1 // pred_region
      _
    $region17: #{tpu_custom_call.1} parent=1 // pred_fallthru
      _
    // Predicated region
    $region18: #{tpu_custom_call.1} parent=1 // pred_check
      _
    $region19: #{tpu_custom_call.1} parent=1 // pred_check_branch
      %21 = sbr.rel (0) target = $region21
    $region20: #{tpu_custom_call.1} parent=1 // pred_region
      _
    $region21: #{tpu_custom_call.1} parent=1 // pred_fallthru
      _
    %v23 = vld [vmem:[%s1] sm:$0xf]
    %v24 = vld [vmem:[%s1 + $0x4] sm:$0xf]
    %v25 = vld [vmem:[%s1 + $0x8] sm:$0xf]
    %v26 = vld [vmem:[%s1 + $0xc] sm:$0xf]
    %v27 = vld [vmem:[%s0] sm:$0xf]
    %v28 = vld [vmem:[%s0 + $0x4] sm:$0xf]
    %v29 = vld [vmem:[%s0 + $0x8] sm:$0xf]
    %v30 = vld [vmem:[%s0 + $0xc] sm:$0xf]
    %v31 = vld [vmem:[%s2] sm:$0xff]
    %v32 = vld [vmem:[%s2 + $0x8] sm:$0xff]
    %v33 = vld [vmem:[%s2 + $0x10] sm:$0xff]
    %v34 = vld [vmem:[%s2 + $0x18] sm:$0xff]
    %36 = vset.pattern.permute.xlu0 0
    %37 = vperm.xlu0 %36, %v31
    %v38 = vpop.permute.xlu0 %37
    %41 = vset.pattern.permute.xlu0 0
    %42 = vperm.xlu0 %41, %v32
    %v43 = vpop.permute.xlu0 %42
    %46 = vset.pattern.permute.xlu0 0
    %47 = vperm.xlu0 %46, %v33
    %v48 = vpop.permute.xlu0 %47
    %51 = vset.pattern.permute.xlu0 0
    %52 = vperm.xlu0 %51, %v34
    %v53 = vpop.permute.xlu0 %52
    %v59 = vunpack.c.l.b16 %v23
    %v60 = vunpack.c.l.b16 %v24
    %v61 = vunpack.c.l.b16 %v25
    %v62 = vunpack.c.l.b16 %v26
    %v63 = vpack.c.b16 %v60, %v59
    %v64 = vpack.c.b16 %v62, %v61
    %v69 = vunpack.c.l.b16 %v27
    %v70 = vunpack.c.l.b16 %v28
    %v71 = vunpack.c.l.b16 %v29
    %v72 = vunpack.c.l.b16 %v30
    %v73 = vpack.c.b16 %v70, %v69
    %v74 = vpack.c.b16 %v72, %v71
    %vm77 = vcmask 261120
    %v79 = vsel %vm77, %v63, 0
    %v82 = vsel %vm77, %v64, 0
    %84 = vmatprep.subr.bf16.mxu0 0
    %85 = vmatpush1.bf16.msra.mxu0 %v73
    %86 = vmatprep.subr.bf16.mxu0 0
    %87 = vmatpush1.bf16.msra.mxu0 %v74
    %88 = vmatprep.subr.bf16.mxu0 0
    %89 = vmatpush1.bf16.msra.mxu0 0
    %90 = vmatprep.subr.bf16.mxu0 0
    %91 = vmatpush1.bf16.msra.mxu0 0
    %92 = vmatprep.subr.bf16.mxu0 0
    %93 = vmatpush1.bf16.msra.mxu0 0
    %94 = vmatprep.subr.bf16.mxu0 0
    %95 = vmatpush1.bf16.msra.mxu0 0
    %96 = vmatprep.subr.bf16.mxu0 0
    %97 = vmatpush1.bf16.msra.mxu0 0
    %98 = vmatprep.subr.bf16.mxu0 0
    %99 = vmatpush1.bf16.msra.mxu0 0
    %100 = vmatprep.subr.bf16.mxu0 0
    %101 = vmatpush1.bf16.msra.mxu0 0
    %102 = vmatprep.subr.bf16.mxu0 0
    %103 = vmatpush1.bf16.msra.mxu0 0
    %104 = vmatprep.subr.bf16.mxu0 0
    %105 = vmatpush1.bf16.msra.mxu0 0
    %106 = vmatprep.subr.bf16.mxu0 0
    %107 = vmatpush1.bf16.msra.mxu0 0
    %108 = vmatprep.subr.bf16.mxu0 0
    %109 = vmatpush1.bf16.msra.mxu0 0
    %110 = vmatprep.subr.bf16.mxu0 0
    %111 = vmatpush1.bf16.msra.mxu0 0
    %112 = vmatprep.subr.bf16.mxu0 0
    %113 = vmatpush1.bf16.msra.mxu0 0
    %114 = vmatprep.subr.bf16.mxu0 0
    %115 = vmatpush1.bf16.msra.mxu0 0
    %116 = vmatprep.mubr.bf16.mxu0 0
    %117 = vmatmul.mubr.bf16.gmra.mrb[0].mxu0 %v79
    %v118 = vpop.f32.mrb[0].mxu0
    %v119 = vadd.f32 %v38, %v118
    %v120 = vpop.f32.mrb[0].mxu0
    %v121 = vpop.f32.mrb[0].mxu0
    %v122 = vadd.f32 %v43, %v121
    %v123 = vpop.f32.mrb[0].mxu0
    %124 = vmatprep.mubr.bf16.mxu0 0
    %125 = vmatmul.mubr.bf16.gmra.mrb[0].mxu0 %v82
    %v126 = vpop.f32.mrb[0].mxu0
    %v127 = vadd.f32 %v48, %v126
    %v128 = vpop.f32.mrb[0].mxu0
    %v129 = vpop.f32.mrb[0].mxu0
    %v130 = vadd.f32 %v53, %v129
    %v131 = vpop.f32.mrb[0].mxu0
    %132 = vdwg.mxu0
    %v133 = vmax.f32 %v119, 0.0
    %v134 = vmax.f32 %v122, 0.0
    %v135 = vmax.f32 %v127, 0.0
    %v136 = vmax.f32 %v130, 0.0
    %v137 = vld [vmem:[%s3] sm:$0x1]
    %v138 = vpack.c.bf16 %v134, %v133
    %v139 = vpack.c.bf16 %v136, %v135
    %s140 = sld [smem:[#allocation2]]
    %v141 = vstv %s140
    %v143 = vsel %vm77, %v137, 0
    %145 = vmatprep.subr.bf16.mxu0 0
    %146 = vmatpush1.bf16.msra.mxu0 %v138
    %147 = vmatprep.subr.bf16.mxu0 0
    %148 = vmatpush1.bf16.msra.mxu0 %v139
    %149 = vmatprep.subr.bf16.mxu0 0
    %150 = vmatpush1.bf16.msra.mxu0 0
    %151 = vmatprep.subr.bf16.mxu0 0
    %152 = vmatpush1.bf16.msra.mxu0 0
    %153 = vmatprep.subr.bf16.mxu0 0
    %154 = vmatpush1.bf16.msra.mxu0 0
    %155 = vmatprep.subr.bf16.mxu0 0
    %156 = vmatpush1.bf16.msra.mxu0 0
    %157 = vmatprep.subr.bf16.mxu0 0
    %158 = vmatpush1.bf16.msra.mxu0 0
    %159 = vmatprep.subr.bf16.mxu0 0
    %160 = vmatpush1.bf16.msra.mxu0 0
    %161 = vmatprep.subr.bf16.mxu0 0
    %162 = vmatpush1.bf16.msra.mxu0 0
    %163 = vmatprep.subr.bf16.mxu0 0
    %164 = vmatpush1.bf16.msra.mxu0 0
    %165 = vmatprep.subr.bf16.mxu0 0
    %166 = vmatpush1.bf16.msra.mxu0 0
    %167 = vmatprep.subr.bf16.mxu0 0
    %168 = vmatpush1.bf16.msra.mxu0 0
    %169 = vmatprep.subr.bf16.mxu0 0
    %170 = vmatpush1.bf16.msra.mxu0 0
    %171 = vmatprep.subr.bf16.mxu0 0
    %172 = vmatpush1.bf16.msra.mxu0 0
    %173 = vmatprep.subr.bf16.mxu0 0
    %174 = vmatpush1.bf16.msra.mxu0 0
    %175 = vmatprep.subr.bf16.mxu0 0
    %176 = vmatpush1.bf16.msra.mxu0 0
    %177 = vmatprep.mubr.bf16.mxu0 0
    %178 = vmatmul.mubr.bf16.gmra.mrb[0].mxu0 %v143
    %v179 = vpop.f32.mrb[0].mxu0
    %v180 = vadd.f32 %v141, %v179
    %v181 = vpop.f32.mrb[0].mxu0
    %v182 = vpop.f32.mrb[0].mxu0
    %v183 = vpop.f32.mrb[0].mxu0
    %184 = vdwg.mxu0
    %v185 = vsub.f32 0.0, %v180
    %v186 = vmul.f32 %v185, 1.442695
    %v187 = vpow.pop %v186
    %v188 = vadd.f32 %v187, 1.0
    %v189 = vrcp.pop %v188
    %190 = vst [vmem:[#allocation3] sm:$0x1] %v189
    // Predicated region
    $region22: #{tpu_custom_call.1} parent=1 // pred_check
      _
    $region23: #{tpu_custom_call.1} parent=1 // pred_check_branch
      %192 = sbr.rel (0) target = $region25
    $region24: #{tpu_custom_call.1} parent=1 // pred_region
      %s194 = ssub.s32 16, 16
      %195 = vsyncadd [#allocation4], %s194
      %s197 = sshll.u32 [#allocation3], 4
      %s198 = int_to_ptr.vmem [resolvable:$true] %s197
      %200 = dma.vmem_to_hbm [thread:$0]  %s198, 16, %s5, [#allocation4]
    $region25: #{tpu_custom_call.1} parent=1 // pred_fallthru
      _
    // Predicated region
    $region26: #{tpu_custom_call.1} parent=1 // pred_check
      _
    $region27: #{tpu_custom_call.1} parent=1 // pred_check_branch
      %202 = sbr.rel (0) target = $region29
    $region28: #{tpu_custom_call.1} parent=1 // pred_region
      %203 = dma.done [#allocation4], 16
    $region29: #{tpu_custom_call.1} parent=1 // pred_fallthru
      _
    %204 = vsyncpa [#allocation4], 1

</llo_original>
